<compile_context>
chip_gen: v7x
topology: tpu7x:2x2x1
jax: 0.10.0
libtpu: 0.0.40
codegen_flags: <defaults>
</compile_context>

<pallas_src>
import jax
import jax.numpy as jnp
from jax import lax
from jax.experimental import pallas as pl
from jax.experimental.pallas import tpu as pltpu

BN_EPS = 1e-5
# _TAP_GROUPS[parity][tap] -> which 3x3 kernel rows/cols fold into that 2x2 tap.
_TAP_GROUPS = (((0,), (1, 2)), ((0, 1), (2,)))
_MAX_UNROLL_WIDTH_TILES = 4


# --------------------------------------------------------------------------- #
# hardware / tiling helpers
# --------------------------------------------------------------------------- #
def _vmem_capacity_bytes():
    try:
        info = pltpu.get_tpu_info()
        return int(getattr(info, "vmem_capacity_bytes", 64 * 1024 * 1024))
    except Exception:
        return 64 * 1024 * 1024  # conservative fallback (v7x per-TC)


def _pass1_step_bytes(rt, W, Cin, Cout, KC, NC):
    """Estimated per-grid-step VMEM for pass 1 (double-buffered in/out)."""
    WoC = 2 * W * Cout
    in_b = 2 * (rt + 2) * (W + 2) * Cin * 2   # bf16 halo input tile
    w_b = 2 * 4 * KC * NC * 2                 # bf16 folded weights (grid invariant)
    out_b = 2 * 2 * rt * WoC * 2              # bf16 conv output tile
    st_b = 2 * 2 * 2 * WoC * 4                # f32 stats partials
    acc_b = 2 * rt * NC * 4                   # f32 accumulator temporaries
    return in_b + w_b + out_b + st_b + acc_b


def _choose_width_tile(W, Cin, Cout):
    """WT so that the matmul N dim 2*WT*Cout ~ 512 and K = (WT+2)*Cin grows."""
    wt = max(1, 256 // max(Cin, Cout))
    wt = min(wt, W)
    while W % wt:
        wt -= 1
    return wt


def _choose_row_tile(H, W, Cin, Cout, KC, NC, vmem_budget):
    """Largest multiple of 8 dividing H, <= 128, that fits the VMEM budget."""
    if H % 8 != 0:
        return H  # block dim == full dim is always allowed
    best = 8
    rt = 8
    while rt <= min(H, 128):
        if H % rt == 0 and _pass1_step_bytes(rt, W, Cin, Cout, KC, NC) <= vmem_budget:
            best = rt
        rt += 8
    return best


def _choose_rows_tile(rows, WoC):
    """Pass-2 row tile: big lane-dense blocks (~4 MiB), decoupled from pass 1."""
    if rows % 8 != 0:
        return rows
    per_row = WoC * (2 + 4)  # bf16 in + f32 out
    rt = max(8, min(rows, ((4 * 1024 * 1024) // per_row) // 8 * 8))
    while rows % rt:
        rt -= 8
    return max(rt, 8)


# --------------------------------------------------------------------------- #
# effective weights: fold upsample parity taps (r,s), column parity dj and the
# width-tile block-diagonal structure into one (KC, NC) matrix per (di, r).
# Row index: jb*Cin + ci   (jb in [0, WT+2), padded-input column within tile)
# Col index: (jw*2 + dj)*Cout + co   -> matmul output lanes are already in
#                                       upsampled-column-major NHWC order.
# --------------------------------------------------------------------------- #
def _effective_weights(weight_oihw, WT, Cin, Cout):
    w_hwio = jnp.transpose(weight_oihw, (2, 3, 1, 0)).astype(jnp.float32)  # (3,3,Ci,Co)
    KC = (WT + 2) * Cin
    NC = 2 * WT * Cout
    mats = []
    for di in range(2):
        for r in range(2):
            w4 = jnp.zeros((WT + 2, Cin, WT, 2, Cout), jnp.float32)
            for dj in range(2):
                for s in range(2):
                    w_eff = jnp.zeros((Cin, Cout), jnp.float32)
                    for kh in _TAP_GROUPS[di][r]:
                        for kw in _TAP_GROUPS[dj][s]:
                            w_eff = w_eff + w_hwio[kh, kw]
                    # shift matrix: ones at [jw + dj + s, jw]
                    shift = jnp.eye(WT + 2, WT, k=-(dj + s), dtype=jnp.float32)
                    w4 = w4.at[:, :, :, dj, :].add(
                        jnp.einsum("JW,io->JiWo", shift, w_eff))
            mats.append(w4.reshape(KC, NC))
    return jnp.stack(mats, axis=0).astype(jnp.bfloat16)  # (4, KC, NC), index di*2+r


# --------------------------------------------------------------------------- #
# pass 1: fused upsample+conv (parity decomposition) + BN partial statistics
# --------------------------------------------------------------------------- #
def _make_conv_stats_kernel(n_wt, WT, KC, NC, RT, Cin):
    wt_cin = WT * Cin

    def kernel(x_ref, w_ref, o_ref, s_ref):
        # x_ref: (1, 1, RT+2, (W+2)*Cin) bf16 halo input tile (lane-dense)
        # w_ref: (4, KC, NC)              bf16 folded effective weights
        # o_ref: (1, 2, RT, Wo*Cout)      bf16 conv tile; dim1 = row parity di,
        #                                 lanes = (2j+dj)*Cout + co
        # s_ref: (1, 1, 2, Wo*Cout)       f32 per-lane [sum ; sum of squares]
        def tile_body(col0, lane0):
            psum = jnp.zeros((1, NC), jnp.float32)
            psq = jnp.zeros((1, NC), jnp.float32)
            for di in range(2):
                acc = jnp.zeros((RT, NC), jnp.float32)
                for r in range(2):
                    lhs = x_ref[0, 0, pl.ds(di + r, RT), pl.ds(col0, KC)]  # (RT, KC)
                    acc = acc + jnp.dot(lhs, w_ref[di * 2 + r],
                                        preferred_element_type=jnp.float32)
                o_ref[0, di, :, pl.ds(lane0, NC)] = acc.astype(o_ref.dtype)
                psum = psum + jnp.sum(acc, axis=0, keepdims=True)
                psq = psq + jnp.sum(acc * acc, axis=0, keepdims=True)
            s_ref[0, 0, 0:1, pl.ds(lane0, NC)] = psum
            s_ref[0, 0, 1:2, pl.ds(lane0, NC)] = psq

        if n_wt <= _MAX_UNROLL_WIDTH_TILES:
            for jt in range(n_wt):
                tile_body(jt * wt_cin, jt * NC)
        else:
            # counted loop bounds vreg pressure / compile time at real widths
            def loop_body(jt, carry):
                tile_body(pl.multiple_of(jt * wt_cin, wt_cin),
                          pl.multiple_of(jt * NC, NC))
                return carry
            lax.fori_loop(0, n_wt, loop_body, 0)

    return kernel


# --------------------------------------------------------------------------- #
# pass 2: per-channel affine (folded BN) + ReLU, lane dense, independent tiling
# --------------------------------------------------------------------------- #
def _bn_relu_kernel(y_ref, scale_ref, shift_ref, o_ref):
    # y_ref: (RT2, Wo*Cout) bf16; scale/shift: (1, Wo*Cout) f32; o_ref: f32
    y = y_ref[...].astype(jnp.float32)
    o_ref[...] = jnp.maximum(y * scale_ref[...] + shift_ref[...], 0.0)


# --------------------------------------------------------------------------- #
# public forward (PyTorch-compatible NCHW in / NCHW out)
# --------------------------------------------------------------------------- #
def up_conv_forward(x_nchw, weight_oihw, bias, gamma, beta, row_tile=None):
    N, Cin, H, W = x_nchw.shape
    Cout = weight_oihw.shape[0]
    Ho, Wo = 2 * H, 2 * W
    WoC = Wo * Cout

    WT = _choose_width_tile(W, Cin, Cout)
    n_wt = W // WT
    KC = (WT + 2) * Cin
    NC = 2 * WT * Cout

    cap = _vmem_capacity_bytes()
    if row_tile is None:
        RT = _choose_row_tile(H, W, Cin, Cout, KC, NC, int(0.55 * cap))
    else:
        RT = row_tile
    assert H % RT == 0
    n_rb = H // RT

    # ---- wrapper glue: transpose+cast(bf16)+pad fuse into one XLA pass -------
    x_nhwc = jnp.transpose(x_nchw, (0, 2, 3, 1)).astype(jnp.bfloat16)
    x_pad = jnp.pad(x_nhwc, ((0, 0), (1, 1), (1, 1), (0, 0)))
    x_ld = x_pad.reshape(N, H + 2, (W + 2) * Cin)          # lane-dense padded view
    if n_rb == 1:
        x_halo = x_ld[:, None, :, :]                        # free reshape
    else:
        # halo row gather: +2-row overlap per block only, caps per-step VMEM
        rows = (jnp.arange(n_rb) * RT)[:, None] + jnp.arange(RT + 2)[None, :]
        x_halo = x_ld[:, rows, :]                            # (N, n_rb, RT+2, (W+2)*Cin)

    w_bd = _effective_weights(weight_oihw, WT, Cin, Cout)    # (4, KC, NC) bf16
    del bias  # exactly cancelled by training-mode BN mean subtraction

    step_bytes = _pass1_step_bytes(RT, W, Cin, Cout, KC, NC)
    vmem_limit1 = min(int(0.9 * cap), max(32 * 1024 * 1024, 2 * step_bytes))

    conv_kernel = _make_conv_stats_kernel(n_wt, WT, KC, NC, RT, Cin)
    conv_out, partial = pl.pallas_call(
        conv_kernel,
        out_shape=(jax.ShapeDtypeStruct((N, 2, H, WoC), jnp.bfloat16),
                   jax.ShapeDtypeStruct((N, n_rb, 2, WoC), jnp.float32)),
        grid=(N, n_rb),
        in_specs=[
            pl.BlockSpec((1, 1, RT + 2, (W + 2) * Cin), lambda nb, rb: (nb, rb, 0, 0)),
            pl.BlockSpec((4, KC, NC), lambda nb, rb: (0, 0, 0)),
        ],
        out_specs=(
            pl.BlockSpec((1, 2, RT, WoC), lambda nb, rb: (nb, 0, rb, 0)),
            pl.BlockSpec((1, 1, 2, WoC), lambda nb, rb: (nb, rb, 0, 0)),
        ),
        compiler_params=pltpu.CompilerParams(
            dimension_semantics=("parallel", "parallel"),
            vmem_limit_bytes=vmem_limit1),
        cost_estimate=pl.CostEstimate(
            flops=8 * N * H * n_wt * KC * NC,
            transcendentals=0,
            bytes_accessed=(x_halo.size * 2 + w_bd.size * 2
                            + N * 2 * H * WoC * 2 + N * n_rb * 2 * WoC * 4)),
    )(x_halo, w_bd)

    # tiny global BN reduction + affine parameter math (plain JAX, negligible)
    # TODO(synk): switch to shifted/Welford moments if E[x^2]-E[x]^2 loses
    #             precision at very large N*H*W.
    sums = partial.sum(axis=(0, 1))                          # (2, WoC)
    per_ch = sums.reshape(2, Wo, Cout).sum(axis=1)           # (2, Cout)
    count = N * Ho * Wo
    mean = per_ch[0] / count
    var = jnp.maximum(per_ch[1] / count - mean * mean, 0.0)  # biased var (train BN)
    inv = lax.rsqrt(var + BN_EPS)
    scale = gamma.astype(jnp.float32) * inv
    shift = beta.astype(jnp.float32) - mean * scale
    scale_row = jnp.tile(scale, Wo)[None, :]                 # lane (2j+dj)*Cout + co
    shift_row = jnp.tile(shift, Wo)[None, :]

    rows_total = N * 2 * H
    RT2 = _choose_rows_tile(rows_total, WoC)
    y_flat = conv_out.reshape(rows_total, WoC)               # free metadata reshape
    vmem_limit2 = min(int(0.9 * cap),
                      max(32 * 1024 * 1024, 8 * RT2 * WoC * 6))

    out_flat = pl.pallas_call(
        _bn_relu_kernel,
        out_shape=jax.ShapeDtypeStruct((rows_total, WoC), jnp.float32),
        grid=(rows_total // RT2,),
        in_specs=[
            pl.BlockSpec((RT2, WoC), lambda rb: (rb, 0)),
            pl.BlockSpec((1, WoC), lambda rb: (0, 0)),
            pl.BlockSpec((1, WoC), lambda rb: (0, 0)),
        ],
        out_specs=pl.BlockSpec((RT2, WoC), lambda rb: (rb, 0)),
        compiler_params=pltpu.CompilerParams(
            dimension_semantics=("parallel",),
            vmem_limit_bytes=vmem_limit2),
        cost_estimate=pl.CostEstimate(
            flops=3 * rows_total * WoC,
            transcendentals=0,
            bytes_accessed=rows_total * WoC * (2 + 4) + 2 * WoC * 4),
    )(y_flat, scale_row, shift_row)

    # parity / channel de-interleave to NCHW (column parity is already folded
    # into lanes, so this is a single XLA transpose; see TODO at top).
    y5 = out_flat.reshape(N, 2, H, Wo, Cout)                 # (n, di, i, 2j+dj, co)
    return jnp.transpose(y5, (0, 4, 2, 1, 3)).reshape(N, Cout, Ho, Wo)


# --------------------------------------------------------------------------- #
# pure-JAX reference (PyTorch semantics) for validation
# --------------------------------------------------------------------------- #
def _reference_up_conv(x_nchw, weight_oihw, bias, gamma, beta):
    x_up = jnp.repeat(jnp.repeat(x_nchw, 2, axis=2), 2, axis=3)
    y = lax.conv_general_dilated(
        x_up.astype(jnp.float32), weight_oihw.astype(jnp.float32),
        window_strides=(1, 1), padding=((1, 1), (1, 1)),
        dimension_numbers=("NCHW", "OIHW", "NCHW"),
        precision=lax.Precision.HIGHEST)
    y = y + bias[None, :, None, None]
    mean = y.mean(axis=(0, 2, 3), keepdims=True)
    var = ((y - mean) ** 2).mean(axis=(0, 2, 3), keepdims=True)
    y = (y - mean) * lax.rsqrt(var + BN_EPS)
    y = y * gamma[None, :, None, None] + beta[None, :, None, None]
    return jnp.maximum(y, 0.0)


if __name__ == "__main__":
    key = jax.random.PRNGKey(0)
    k_x, k_w, k_b = jax.random.split(key, 3)

    N, Cin, H, W = 2, 4, 16, 16
    Cout = 8

    x = jax.random.normal(k_x, (N, Cin, H, W), jnp.float32)
    fan_in = Cin * 3 * 3
    bound = 1.0 / (fan_in ** 0.5)
    weight = jax.random.uniform(k_w, (Cout, Cin, 3, 3), jnp.float32, -bound, bound)
    bias = jax.random.uniform(k_b, (Cout,), jnp.float32, -bound, bound)
    gamma = jnp.ones((Cout,), jnp.float32)   # BatchNorm2d default weight
    beta = jnp.zeros((Cout,), jnp.float32)   # BatchNorm2d default bias

    fwd = jax.jit(up_conv_forward)
    out = jax.block_until_ready(fwd(x, weight, bias, gamma, beta))

    assert out.shape == (N, Cout, 2 * H, 2 * W), out.shape
    assert out.dtype == jnp.float32
    assert bool(jnp.all(out >= 0.0))         # ReLU invariant

    ref = _reference_up_conv(x, weight, bias, gamma, beta)
    max_err = float(jnp.max(jnp.abs(out - ref)))
    mean_err = float(jnp.mean(jnp.abs(out - ref)))
    # bf16 matmul operands + bf16 conv intermediate -> ~1e-2 worst-case abs error
    # after unit-variance BN normalization; mean error stays ~1e-3.
    assert max_err < 4e-2, f"mismatch vs reference, max abs err = {max_err}"
    assert mean_err < 5e-3, f"mismatch vs reference, mean abs err = {mean_err}"

    print("KERNEL_OK")
</pallas_src>

<mosaic_0001>
module attributes {stable_mosaic.version = 11 : i64} {
  func.func @kernel(%arg0: i32, %arg1: i32, %arg2: memref<1x1x18x72xbf16, #tpu.memory_space<vmem>>, %arg3: memref<4x72x256xbf16, #tpu.memory_space<vmem>>, %arg4: memref<1x2x16x256xbf16, #tpu.memory_space<vmem>>, %arg5: memref<1x1x2x256xf32, #tpu.memory_space<vmem>>) attributes {dimension_semantics = [#tpu.dimension_semantics<parallel>, #tpu.dimension_semantics<parallel>], iteration_bounds = array<i64: 2, 1>, scalar_prefetch = 0 : i64, scratch_operands = 0 : i64, tpu.core_type = #tpu.core_type<tc>, window_params = [{transform_indices = @transform_0, window_bounds = array<i64: 1, 1, 18, 72>}, {pipeline_mode = #tpu.pipeline_mode<synchronous>, transform_indices = @transform_1, window_bounds = array<i64: 4, 72, 256>}, {transform_indices = @transform_2, window_bounds = array<i64: 1, 2, 16, 256>}, {transform_indices = @transform_3, window_bounds = array<i64: 1, 1, 2, 256>}]} {
    %cst = arith.constant 0.000000e+00 : f32
    %0 = vector.broadcast %cst : f32 to vector<1x256xf32>
    %cst_0 = arith.constant 0.000000e+00 : f32
    %1 = vector.broadcast %cst_0 : f32 to vector<1x256xf32>
    %cst_1 = arith.constant 0.000000e+00 : f32
    %2 = vector.broadcast %cst_1 : f32 to vector<16x256xf32>
    %c0 = arith.constant 0 : index
    %c0_2 = arith.constant 0 : index
    %c0_3 = arith.constant 0 : index
    %c0_4 = arith.constant 0 : index
    %3 = vector.load %arg2[%c0, %c0_2, %c0_3, %c0_4] : memref<1x1x18x72xbf16, #tpu.memory_space<vmem>>, vector<1x1x16x72xbf16>
    %4 = vector.shape_cast %3 : vector<1x1x16x72xbf16> to vector<16x72xbf16>
    %c0_5 = arith.constant 0 : index
    %c0_6 = arith.constant 0 : index
    %c0_7 = arith.constant 0 : index
    %5 = vector.load %arg3[%c0_5, %c0_6, %c0_7] : memref<4x72x256xbf16, #tpu.memory_space<vmem>>, vector<1x72x256xbf16>
    %6 = vector.shape_cast %5 : vector<1x72x256xbf16> to vector<72x256xbf16>
    %cst_8 = arith.constant dense<0.000000e+00> : vector<16x256xf32>
    %7 = tpu.matmul %4, %6, %cst_8 {dimension_numbers = #tpu.dot_dimension_numbers<[1], [0], [0], [1], [0, 0, 1, 1], [], []>} : vector<16x72xbf16>, vector<72x256xbf16>, vector<16x256xf32> -> vector<16x256xf32>
    %8 = arith.addf %2, %7 : vector<16x256xf32>
    %c0_9 = arith.constant 0 : index
    %c0_10 = arith.constant 0 : index
    %c1 = arith.constant 1 : index
    %c0_11 = arith.constant 0 : index
    %9 = vector.load %arg2[%c0_9, %c0_10, %c1, %c0_11] : memref<1x1x18x72xbf16, #tpu.memory_space<vmem>>, vector<1x1x16x72xbf16>
    %10 = vector.shape_cast %9 : vector<1x1x16x72xbf16> to vector<16x72xbf16>
    %c1_12 = arith.constant 1 : index
    %c0_13 = arith.constant 0 : index
    %c0_14 = arith.constant 0 : index
    %11 = vector.load %arg3[%c1_12, %c0_13, %c0_14] : memref<4x72x256xbf16, #tpu.memory_space<vmem>>, vector<1x72x256xbf16>
    %12 = vector.shape_cast %11 : vector<1x72x256xbf16> to vector<72x256xbf16>
    %cst_15 = arith.constant dense<0.000000e+00> : vector<16x256xf32>
    %13 = tpu.matmul %10, %12, %cst_15 {dimension_numbers = #tpu.dot_dimension_numbers<[1], [0], [0], [1], [0, 0, 1, 1], [], []>} : vector<16x72xbf16>, vector<72x256xbf16>, vector<16x256xf32> -> vector<16x256xf32>
    %14 = arith.addf %8, %13 : vector<16x256xf32>
    %15 = arith.truncf %14 : vector<16x256xf32> to vector<16x256xbf16>
    %c0_16 = arith.constant 0 : index
    %c0_17 = arith.constant 0 : index
    %c0_18 = arith.constant 0 : index
    %c0_19 = arith.constant 0 : index
    %16 = vector.load %arg4[%c0_16, %c0_17, %c0_18, %c0_19] : memref<1x2x16x256xbf16, #tpu.memory_space<vmem>>, vector<1x1x16x256xbf16>
    %17 = vector.shape_cast %16 : vector<1x1x16x256xbf16> to vector<16x256xbf16>
    %18 = vector.shape_cast %15 : vector<16x256xbf16> to vector<1x1x16x256xbf16>
    tpu.vector_store %arg4[%c0_16, %c0_17, %c0_18, %c0_19], %18 {strides = array<i32>} : memref<1x2x16x256xbf16, #tpu.memory_space<vmem>>, vector<1x1x16x256xbf16>,
    %cst_20 = arith.constant dense<0.000000e+00> : vector<256xf32>
    %19 = vector.multi_reduction <add>, %14, %cst_20 [0] : vector<16x256xf32> to vector<256xf32>
    %20 = vector.shape_cast %19 : vector<256xf32> to vector<1x256xf32>
    %21 = arith.addf %0, %20 : vector<1x256xf32>
    %22 = arith.mulf %14, %14 : vector<16x256xf32>
    %cst_21 = arith.constant dense<0.000000e+00> : vector<256xf32>
    %23 = vector.multi_reduction <add>, %22, %cst_21 [0] : vector<16x256xf32> to vector<256xf32>
    %24 = vector.shape_cast %23 : vector<256xf32> to vector<1x256xf32>
    %25 = arith.addf %1, %24 : vector<1x256xf32>
    %cst_22 = arith.constant 0.000000e+00 : f32
    %26 = vector.broadcast %cst_22 : f32 to vector<16x256xf32>
    %c0_23 = arith.constant 0 : index
    %c0_24 = arith.constant 0 : index
    %c1_25 = arith.constant 1 : index
    %c0_26 = arith.constant 0 : index
    %27 = vector.load %arg2[%c0_23, %c0_24, %c1_25, %c0_26] : memref<1x1x18x72xbf16, #tpu.memory_space<vmem>>, vector<1x1x16x72xbf16>
    %28 = vector.shape_cast %27 : vector<1x1x16x72xbf16> to vector<16x72xbf16>
    %c2 = arith.constant 2 : index
    %c0_27 = arith.constant 0 : index
    %c0_28 = arith.constant 0 : index
    %29 = vector.load %arg3[%c2, %c0_27, %c0_28] : memref<4x72x256xbf16, #tpu.memory_space<vmem>>, vector<1x72x256xbf16>
    %30 = vector.shape_cast %29 : vector<1x72x256xbf16> to vector<72x256xbf16>
    %cst_29 = arith.constant dense<0.000000e+00> : vector<16x256xf32>
    %31 = tpu.matmul %28, %30, %cst_29 {dimension_numbers = #tpu.dot_dimension_numbers<[1], [0], [0], [1], [0, 0, 1, 1], [], []>} : vector<16x72xbf16>, vector<72x256xbf16>, vector<16x256xf32> -> vector<16x256xf32>
    %32 = arith.addf %26, %31 : vector<16x256xf32>
    %c0_30 = arith.constant 0 : index
    %c0_31 = arith.constant 0 : index
    %c2_32 = arith.constant 2 : index
    %c0_33 = arith.constant 0 : index
    %33 = vector.load %arg2[%c0_30, %c0_31, %c2_32, %c0_33] : memref<1x1x18x72xbf16, #tpu.memory_space<vmem>>, vector<1x1x16x72xbf16>
    %34 = vector.shape_cast %33 : vector<1x1x16x72xbf16> to vector<16x72xbf16>
    %c3 = arith.constant 3 : index
    %c0_34 = arith.constant 0 : index
    %c0_35 = arith.constant 0 : index
    %35 = vector.load %arg3[%c3, %c0_34, %c0_35] : memref<4x72x256xbf16, #tpu.memory_space<vmem>>, vector<1x72x256xbf16>
    %36 = vector.shape_cast %35 : vector<1x72x256xbf16> to vector<72x256xbf16>
    %cst_36 = arith.constant dense<0.000000e+00> : vector<16x256xf32>
    %37 = tpu.matmul %34, %36, %cst_36 {dimension_numbers = #tpu.dot_dimension_numbers<[1], [0], [0], [1], [0, 0, 1, 1], [], []>} : vector<16x72xbf16>, vector<72x256xbf16>, vector<16x256xf32> -> vector<16x256xf32>
    %38 = arith.addf %32, %37 : vector<16x256xf32>
    %39 = arith.truncf %38 : vector<16x256xf32> to vector<16x256xbf16>
    %c0_37 = arith.constant 0 : index
    %c1_38 = arith.constant 1 : index
    %c0_39 = arith.constant 0 : index
    %c0_40 = arith.constant 0 : index
    %40 = vector.load %arg4[%c0_37, %c1_38, %c0_39, %c0_40] : memref<1x2x16x256xbf16, #tpu.memory_space<vmem>>, vector<1x1x16x256xbf16>
    %41 = vector.shape_cast %40 : vector<1x1x16x256xbf16> to vector<16x256xbf16>
    %42 = vector.shape_cast %39 : vector<16x256xbf16> to vector<1x1x16x256xbf16>
    tpu.vector_store %arg4[%c0_37, %c1_38, %c0_39, %c0_40], %42 {strides = array<i32>} : memref<1x2x16x256xbf16, #tpu.memory_space<vmem>>, vector<1x1x16x256xbf16>,
    %cst_41 = arith.constant dense<0.000000e+00> : vector<256xf32>
    %43 = vector.multi_reduction <add>, %38, %cst_41 [0] : vector<16x256xf32> to vector<256xf32>
    %44 = vector.shape_cast %43 : vector<256xf32> to vector<1x256xf32>
    %45 = arith.addf %21, %44 : vector<1x256xf32>
    %46 = arith.mulf %38, %38 : vector<16x256xf32>
    %cst_42 = arith.constant dense<0.000000e+00> : vector<256xf32>
    %47 = vector.multi_reduction <add>, %46, %cst_42 [0] : vector<16x256xf32> to vector<256xf32>
    %48 = vector.shape_cast %47 : vector<256xf32> to vector<1x256xf32>
    %49 = arith.addf %25, %48 : vector<1x256xf32>
    %c0_43 = arith.constant 0 : index
    %c0_44 = arith.constant 0 : index
    %c0_45 = arith.constant 0 : index
    %c0_46 = arith.constant 0 : index
    %50 = vector.load %arg5[%c0_43, %c0_44, %c0_45, %c0_46] : memref<1x1x2x256xf32, #tpu.memory_space<vmem>>, vector<1x1x1x256xf32>
    %51 = vector.shape_cast %50 : vector<1x1x1x256xf32> to vector<1x256xf32>
    %52 = vector.shape_cast %45 : vector<1x256xf32> to vector<1x1x1x256xf32>
    tpu.vector_store %arg5[%c0_43, %c0_44, %c0_45, %c0_46], %52 {strides = array<i32>} : memref<1x1x2x256xf32, #tpu.memory_space<vmem>>, vector<1x1x1x256xf32>,
    %c0_47 = arith.constant 0 : index
    %c0_48 = arith.constant 0 : index
    %c1_49 = arith.constant 1 : index
    %c0_50 = arith.constant 0 : index
    %53 = vector.load %arg5[%c0_47, %c0_48, %c1_49, %c0_50] : memref<1x1x2x256xf32, #tpu.memory_space<vmem>>, vector<1x1x1x256xf32>
    %54 = vector.shape_cast %53 : vector<1x1x1x256xf32> to vector<1x256xf32>
    %55 = vector.shape_cast %49 : vector<1x256xf32> to vector<1x1x1x256xf32>
    tpu.vector_store %arg5[%c0_47, %c0_48, %c1_49, %c0_50], %55 {strides = array<i32>} : memref<1x1x2x256xf32, #tpu.memory_space<vmem>>, vector<1x1x1x256xf32>,
    return
  }
  func.func @transform_0(%arg0: i32, %arg1: i32) -> (i32, i32, i32, i32) {
    %c0_i32 = arith.constant 0 : i32
    %c0_i32_0 = arith.constant 0 : i32
    %c0_i32_1 = arith.constant 0 : i32
    return %arg0, %arg1, %c0_i32, %c0_i32_0 : i32, i32, i32, i32
  }
  func.func @transform_1(%arg0: i32, %arg1: i32) -> (i32, i32, i32) {
    %c0_i32 = arith.constant 0 : i32
    %c0_i32_0 = arith.constant 0 : i32
    %c0_i32_1 = arith.constant 0 : i32
    %c0_i32_2 = arith.constant 0 : i32
    return %c0_i32, %c0_i32_0, %c0_i32_1 : i32, i32, i32
  }
  func.func @transform_2(%arg0: i32, %arg1: i32) -> (i32, i32, i32, i32) {
    %c0_i32 = arith.constant 0 : i32
    %c0_i32_0 = arith.constant 0 : i32
    %c0_i32_1 = arith.constant 0 : i32
    return %arg0, %c0_i32, %arg1, %c0_i32_0 : i32, i32, i32, i32
  }
  func.func @transform_3(%arg0: i32, %arg1: i32) -> (i32, i32, i32, i32) {
    %c0_i32 = arith.constant 0 : i32
    %c0_i32_0 = arith.constant 0 : i32
    %c0_i32_1 = arith.constant 0 : i32
    return %arg0, %arg1, %c0_i32, %c0_i32_0 : i32, i32, i32, i32
  }
}

module attributes {stable_mosaic.version = 11 : i64} {
  func.func @_bn_relu_kernel(%arg0: i32, %arg1: memref<64x256xbf16, #tpu.memory_space<vmem>>, %arg2: memref<1x256xf32, #tpu.memory_space<vmem>>, %arg3: memref<1x256xf32, #tpu.memory_space<vmem>>, %arg4: memref<64x256xf32, #tpu.memory_space<vmem>>) attributes {dimension_semantics = [#tpu.dimension_semantics<parallel>], iteration_bounds = array<i64: 1>, scalar_prefetch = 0 : i64, scratch_operands = 0 : i64, tpu.core_type = #tpu.core_type<tc>, window_params = [{transform_indices = @transform_0, window_bounds = array<i64: 64, 256>}, {pipeline_mode = #tpu.pipeline_mode<synchronous>, transform_indices = @transform_1, window_bounds = array<i64: 1, 256>}, {pipeline_mode = #tpu.pipeline_mode<synchronous>, transform_indices = @transform_2, window_bounds = array<i64: 1, 256>}, {transform_indices = @transform_3, window_bounds = array<i64: 64, 256>}]} {
    %c0 = arith.constant 0 : index
    %c0_0 = arith.constant 0 : index
    %0 = vector.load %arg1[%c0, %c0_0] : memref<64x256xbf16, #tpu.memory_space<vmem>>, vector<64x256xbf16>
    %1 = arith.extf %0 : vector<64x256xbf16> to vector<64x256xf32>
    %c0_1 = arith.constant 0 : index
    %c0_2 = arith.constant 0 : index
    %2 = vector.load %arg2[%c0_1, %c0_2] : memref<1x256xf32, #tpu.memory_space<vmem>>, vector<1x256xf32>
    %3 = vector.broadcast %2 : vector<1x256xf32> to vector<64x256xf32>
    %4 = arith.mulf %1, %3 : vector<64x256xf32>
    %c0_3 = arith.constant 0 : index
    %c0_4 = arith.constant 0 : index
    %5 = vector.load %arg3[%c0_3, %c0_4] : memref<1x256xf32, #tpu.memory_space<vmem>>, vector<1x256xf32>
    %6 = vector.broadcast %5 : vector<1x256xf32> to vector<64x256xf32>
    %7 = arith.addf %4, %6 : vector<64x256xf32>
    %cst = arith.constant 0.000000e+00 : f32
    %8 = vector.broadcast %cst : f32 to vector<64x256xf32>
    %9 = arith.maximumf %7, %8 : vector<64x256xf32>
    %c0_5 = arith.constant 0 : index
    %c0_6 = arith.constant 0 : index
    %10 = vector.load %arg4[%c0_5, %c0_6] : memref<64x256xf32, #tpu.memory_space<vmem>>, vector<64x256xf32>
    tpu.vector_store %arg4[%c0_5, %c0_6], %9 {strides = array<i32>} : memref<64x256xf32, #tpu.memory_space<vmem>>, vector<64x256xf32>,
    return
  }
  func.func @transform_0(%arg0: i32) -> (i32, i32) {
    %c0_i32 = arith.constant 0 : i32
    %c0_i32_0 = arith.constant 0 : i32
    return %arg0, %c0_i32 : i32, i32
  }
  func.func @transform_1(%arg0: i32) -> (i32, i32) {
    %c0_i32 = arith.constant 0 : i32
    %c0_i32_0 = arith.constant 0 : i32
    %c0_i32_1 = arith.constant 0 : i32
    return %c0_i32, %c0_i32_0 : i32, i32
  }
  func.func @transform_2(%arg0: i32) -> (i32, i32) {
    %c0_i32 = arith.constant 0 : i32
    %c0_i32_0 = arith.constant 0 : i32
    %c0_i32_1 = arith.constant 0 : i32
    return %c0_i32, %c0_i32_0 : i32, i32
  }
  func.func @transform_3(%arg0: i32) -> (i32, i32) {
    %c0_i32 = arith.constant 0 : i32
    %c0_i32_0 = arith.constant 0 : i32
    return %arg0, %c0_i32 : i32, i32
  }
}

</mosaic_0001>

<llo_original>
// kernel: tile.13
$region0: #{tile.13}
  #allocation0 [shape = 's32[1]{0}', space=sflag, size = 0x4, scoped, tag = 'scoped memory for tile.13']
  %s0 = inlined_call_operand.vmem [shape: f32[8], index: 0, kind: input, shape index: {}]
  %s1 = inlined_call_operand.vmem [shape: f32[32,8], index: 1, kind: output, shape index: {}]
  // Predicated region
  $region2: #{tile.13} parent=0 // pred_check
    _
  $region3: #{tile.13} parent=0 // pred_check_branch
    %3 = sbr.rel (0) target = $region5
  $region4: #{tile.13} parent=0 // pred_region
    _
  $region5: #{tile.13} parent=0 // pred_fallthru
    _
  %v4 = vld [vmem:[%s0] ss:$0 sm:$0xff]
  %5 = vst [vmem:[%s1] sm:$0xff] %v4
  %s6 = scalar_lea.vmem %s1, 8
  %7 = vst [vmem:[%s6] sm:$0xff] %v4
  %s8 = scalar_lea.vmem %s1, 16
  %9 = vst [vmem:[%s8] sm:$0xff] %v4
  %s10 = scalar_lea.vmem %s1, 24
  %11 = vst [vmem:[%s10] sm:$0xff] %v4

// kernel: tile.14
$region0: #{tile.14}
  %s0 = inlined_call_operand.vmem [shape: f32[32,8], index: 0, kind: input, shape index: {}]
  %s1 = inlined_call_operand.vmem [shape: f32[1,256], index: 1, kind: output, shape index: {}]
  $region1: #{tile.14} parent=0
    #allocation0 [shape = 'u8[8192]{0}', space=vmem, size = 0x2000, scoped, tag = 'scoped mem for output reshape']
    %s2 = smov 3
    %v3 = vld [vmem:[%s0] ss:$16 sm:%s2]
    %vm4 = vcmask 64512
    %5 = vst.msk [vmem:[#allocation0] ss:$8 sm:$0x3] %vm4, %v3
    %s6 = scalar_lea.vmem %s0, 15
    %s7 = smov 3
    %v8 = vld [vmem:[%s6] ss:$16 sm:%s7]
    %9 = vrot.lane.b32.xlu0 %v8, 120
    %v10 = vpop.permute.xlu0 %9
    %vm11 = vcmask 1048512
    %12 = vst.msk [vmem:[#allocation0] ss:$8 sm:$0x3] %vm11, %v10
    %s13 = scalar_lea.vmem %s0, 14
    %s14 = smov 3
    %v15 = vld [vmem:[%s13] ss:$16 sm:%s14]
    %16 = vrot.lane.b32.xlu0 %v15, 112
    %v17 = vpop.permute.xlu0 %16
    %vm18 = vcmask 982912
    %19 = vst.msk [vmem:[#allocation0] ss:$8 sm:$0x3] %vm18, %v17
    %s20 = scalar_lea.vmem %s0, 13
    %s21 = smov 3
    %v22 = vld [vmem:[%s20] ss:$16 sm:%s21]
    %23 = vrot.lane.b32.xlu0 %v22, 104
    %v24 = vpop.permute.xlu0 %23
    %vm25 = vcmask 917312
    %26 = vst.msk [vmem:[#allocation0] ss:$8 sm:$0x3] %vm25, %v24
    %s27 = scalar_lea.vmem %s0, 12
    %s28 = smov 3
    %v29 = vld [vmem:[%s27] ss:$16 sm:%s28]
    %30 = vrot.lane.b32.xlu0 %v29, 96
    %v31 = vpop.permute.xlu0 %30
    %vm32 = vcmask 851712
    %33 = vst.msk [vmem:[#allocation0] ss:$8 sm:$0x3] %vm32, %v31
    %s34 = scalar_lea.vmem %s0, 11
    %s35 = smov 3
    %v36 = vld [vmem:[%s34] ss:$16 sm:%s35]
    %37 = vrot.lane.b32.xlu0 %v36, 88
    %v38 = vpop.permute.xlu0 %37
    %vm39 = vcmask 786112
    %40 = vst.msk [vmem:[#allocation0] ss:$8 sm:$0x3] %vm39, %v38
    %s41 = scalar_lea.vmem %s0, 10
    %s42 = smov 3
    %v43 = vld [vmem:[%s41] ss:$16 sm:%s42]
    %44 = vrot.lane.b32.xlu0 %v43, 80
    %v45 = vpop.permute.xlu0 %44
    %vm46 = vcmask 720512
    %47 = vst.msk [vmem:[#allocation0] ss:$8 sm:$0x3] %vm46, %v45
    %s48 = scalar_lea.vmem %s0, 9
    %s49 = smov 3
    %v50 = vld [vmem:[%s48] ss:$16 sm:%s49]
    %51 = vrot.lane.b32.xlu0 %v50, 72
    %v52 = vpop.permute.xlu0 %51
    %vm53 = vcmask 654912
    %54 = vst.msk [vmem:[#allocation0] ss:$8 sm:$0x3] %vm53, %v52
    %s55 = scalar_lea.vmem %s0, 8
    %s56 = smov 3
    %v57 = vld [vmem:[%s55] ss:$16 sm:%s56]
    %58 = vrot.lane.b32.xlu0 %v57, 64
    %v59 = vpop.permute.xlu0 %58
    %vm60 = vcmask 589312
    %61 = vst.msk [vmem:[#allocation0] ss:$8 sm:$0x3] %vm60, %v59
    %s62 = scalar_lea.vmem %s0, 7
    %s63 = smov 3
    %v64 = vld [vmem:[%s62] ss:$16 sm:%s63]
    %65 = vrot.lane.b32.xlu0 %v64, 56
    %v66 = vpop.permute.xlu0 %65
    %vm67 = vcmask 523712
    %68 = vst.msk [vmem:[#allocation0] ss:$8 sm:$0x3] %vm67, %v66
    %s69 = scalar_lea.vmem %s0, 6
    %s70 = smov 3
    %v71 = vld [vmem:[%s69] ss:$16 sm:%s70]
    %72 = vrot.lane.b32.xlu0 %v71, 48
    %v73 = vpop.permute.xlu0 %72
    %vm74 = vcmask 458112
    %75 = vst.msk [vmem:[#allocation0] ss:$8 sm:$0x3] %vm74, %v73
    %s76 = scalar_lea.vmem %s0, 5
    %s77 = smov 3
    %v78 = vld [vmem:[%s76] ss:$16 sm:%s77]
    %79 = vrot.lane.b32.xlu0 %v78, 40
    %v80 = vpop.permute.xlu0 %79
    %vm81 = vcmask 392512
    %82 = vst.msk [vmem:[#allocation0] ss:$8 sm:$0x3] %vm81, %v80
    %s83 = scalar_lea.vmem %s0, 4
    %s84 = smov 3
    %v85 = vld [vmem:[%s83] ss:$16 sm:%s84]
    %86 = vrot.lane.b32.xlu0 %v85, 32
    %v87 = vpop.permute.xlu0 %86
    %vm88 = vcmask 326912
    %89 = vst.msk [vmem:[#allocation0] ss:$8 sm:$0x3] %vm88, %v87
    %s90 = scalar_lea.vmem %s0, 3
    %s91 = smov 3
    %v92 = vld [vmem:[%s90] ss:$16 sm:%s91]
    %93 = vrot.lane.b32.xlu0 %v92, 24
    %v94 = vpop.permute.xlu0 %93
    %vm95 = vcmask 261312
    %96 = vst.msk [vmem:[#allocation0] ss:$8 sm:$0x3] %vm95, %v94
    %s97 = scalar_lea.vmem %s0, 2
    %s98 = smov 3
    %v99 = vld [vmem:[%s97] ss:$16 sm:%s98]
    %100 = vrot.lane.b32.xlu0 %v99, 16
    %v101 = vpop.permute.xlu0 %100
    %vm102 = vcmask 195712
    %103 = vst.msk [vmem:[#allocation0] ss:$8 sm:$0x3] %vm102, %v101
    %s104 = scalar_lea.vmem %s0, 1
    %s105 = smov 3
    %v106 = vld [vmem:[%s104] ss:$16 sm:%s105]
    %107 = vrot.lane.b32.xlu0 %v106, 8
    %v108 = vpop.permute.xlu0 %107
    %vm109 = vcmask 130112
    %110 = vst.msk [vmem:[#allocation0] ss:$8 sm:$0x3] %vm109, %v108
    %s112 = sshllo.u32 0, 1
    %v114 = vld [vmem:[#allocation0] sm:%s112]
    %s115 = sshllo.u32 0, 1
    %116 = vst [vmem:[%s1] sm:%s115] %v114
    %s117 = scalar_lea.vmem [#allocation0], 8
    %v118 = vld [vmem:[%s117] sm:%s112]
    %s119 = sshllo.u32 0, 1
    %s120 = scalar_lea.vmem %s1, 1
    %121 = vst [vmem:[%s120] sm:%s119] %v118

// kernel: up_conv_forward.2
$region0: #{up_conv_forward.2}
  #allocation0 [shape = 'u32[]', space=smem, size = 0x4, offset = 0x4, fixed_abs, tag = 'smem constant byte address 0x4 - core index']
  #allocation1 [shape = 'u32[144,128]{1,0:T(1,128)}', space=vmem, size = 0x12000, scoped, tag = 'internal scratch']
  %s0 = inlined_call_operand.vmem [shape: bf16[2,1,18,72], index: 0, kind: input, shape index: {}]
  %s1 = inlined_call_operand.vmem [shape: bf16[4,72,256], index: 1, kind: input, shape index: {}]
  %s2 = inlined_call_operand.vmem [shape: bf16[2,2,16,256], index: 2, kind: output, shape index: {0}]
  %s3 = inlined_call_operand.vmem [shape: f32[2,1,2,256], index: 3, kind: output, shape index: {1}]
  %4 = xla_tuple %s2, %s3
  %s5 = sld [smem:[#allocation0]]
  $region49: #{up_conv_forward.2} parent=0
    _
  %s7 = ssub.s32 1, %s5
  %s8 = scalar_select 0, %s7, %s5
  loop: start=0, step=1, limit=4
  $region2: #{up_conv_forward.2} parent=0 // loop_pre_header
    _
  $region3: #{up_conv_forward.2} parent=0 // loop_header
    %s10 = sphi 0, %s14
    %p11 = scmp.ge.s32.totalorder %s10, 4
    %s17 = sphi 0, %s29
    %s18 = sphi 0, %s25
    %s19 = sphi 0, %s17
    %s20 = sphi 0, %s18
    %s21 = sphi 0, %s19
    %s22 = sphi 0, %s20
    %s34 = sphi 0, %s36
    %s37 = sphi 0, %s34
    %s38 = sphi 0, %s37
    %s54 = sphi 0, %s38
    %s58 = sphi 0, %s58
    %s60 = sphi 0, %s58
    %s61 = sphi 0, %s60
    %s75 = sphi 0, %s61
    %s83 = sphi 0, %s85
    %s86 = sphi 0, %s83
    %s87 = sphi 0, %s86
    %s103 = sphi 0, %s87
    %s111 = sphi 0, %s113
    %s114 = sphi 0, %s111
    %s115 = sphi 0, %s114
    %s131 = sphi 0, %s115
  $region4: #{up_conv_forward.2} parent=0 // loop_header_branch
    %13 = sbr.rel (%p11) target = $region8
  $region5: #{up_conv_forward.2} parent=0 // loop_body
    %s15 = ssub.s32 %s10, 1
    %s16 = ssub.s32 %s10, 2
    %s23 = sadd.s32 1, %s18
    %p24 = scmp.ge.s32.totalorder %s23, 1
    %s25 = scalar_select %p24, 0, %s23
    %s26 = sadd.s32 1, %s17
    %s27 = scalar_select %p24, %s26, %s17
    %p28 = scmp.ge.s32.totalorder %s27, 2
    %s29 = scalar_select %p28, 0, %s27
    %s30 = ssub.s32 %s17, %s29
    %s31 = ssub.s32 %s18, %s25
    %s32 = sor.u32 %s30, %s31
    %p33 = scmp.eq.s32.totalorder %s32, 0
    %s35 = sadd.s32 %s34, 1
    %s36 = scalar_select %p33, %s34, %s35
    %p39 = pneg %p33
    %p40 = scmp.eq.s32.totalorder %s10, 1
    %p41 = por %p39, %p40
    %p42 = scmp.ne.s32.totalorder %s34, %s37
    %p43 = scmp.eq.s32.totalorder %s10, 0
    %p44 = por %p42, %p43
    %p45 = scmp.ne.s32.totalorder %s34, %s37
    %p46 = scmp.eq.s32.totalorder %s15, 1
    %p47 = por %p45, %p46
    %p48 = scmp.ne.s32.totalorder %s37, %s38
    %p49 = scmp.eq.s32.totalorder %s15, 0
    %p50 = por %p48, %p49
    %p51 = scmp.ne.s32.totalorder %s37, %s38
    %p52 = scmp.eq.s32.totalorder %s16, 1
    %p53 = por %p51, %p52
    %p55 = scmp.ne.s32.totalorder %s38, %s54
    %p56 = scmp.eq.s32.totalorder %s16, 0
    %p57 = por %p55, %p56
    %s59 = sadd.s32 %s58, 1
    %p62 = scmp.eq.s32.totalorder %s10, 1
    %p63 = scmp.ne.s32.totalorder %s58, %s60
    %p64 = scmp.eq.s32.totalorder %s10, 0
    %p65 = por %p63, %p64
    %p66 = scmp.ne.s32.totalorder %s58, %s60
    %p67 = scmp.eq.s32.totalorder %s15, 1
    %p68 = por %p66, %p67
    %p69 = scmp.ne.s32.totalorder %s60, %s61
    %p70 = scmp.eq.s32.totalorder %s15, 0
    %p71 = por %p69, %p70
    %p72 = scmp.ne.s32.totalorder %s60, %s61
    %p73 = scmp.eq.s32.totalorder %s16, 1
    %p74 = por %p72, %p73
    %p76 = scmp.ne.s32.totalorder %s61, %s75
    %p77 = scmp.eq.s32.totalorder %s16, 0
    %p78 = por %p76, %p77
    %s79 = ssub.s32 %s17, %s29
    %s80 = ssub.s32 %s18, %s25
    %s81 = sor.u32 %s79, %s80
    %p82 = scmp.eq.s32.totalorder %s81, 0
    %s84 = sadd.s32 %s83, 1
    %s85 = scalar_select %p82, %s83, %s84
    %p88 = pneg %p82
    %p89 = scmp.eq.s32.totalorder %s10, 1
    %p90 = por %p88, %p89
    %p91 = scmp.ne.s32.totalorder %s83, %s86
    %p92 = scmp.eq.s32.totalorder %s10, 0
    %p93 = por %p91, %p92
    %p94 = scmp.ne.s32.totalorder %s83, %s86
    %p95 = scmp.eq.s32.totalorder %s15, 1
    %p96 = por %p94, %p95
    %p97 = scmp.ne.s32.totalorder %s86, %s87
    %p98 = scmp.eq.s32.totalorder %s15, 0
    %p99 = por %p97, %p98
    %p100 = scmp.ne.s32.totalorder %s86, %s87
    %p101 = scmp.eq.s32.totalorder %s16, 1
    %p102 = por %p100, %p101
    %p104 = scmp.ne.s32.totalorder %s87, %s103
    %p105 = scmp.eq.s32.totalorder %s16, 0
    %p106 = por %p104, %p105
    %s107 = ssub.s32 %s17, %s29
    %s108 = ssub.s32 %s18, %s25
    %s109 = sor.u32 %s107, %s108
    %p110 = scmp.eq.s32.totalorder %s109, 0
    %s112 = sadd.s32 %s111, 1
    %s113 = scalar_select %p110, %s111, %s112
    %p116 = pneg %p110
    %p117 = scmp.eq.s32.totalorder %s10, 1
    %p118 = por %p116, %p117
    %p119 = scmp.ne.s32.totalorder %s111, %s114
    %p120 = scmp.eq.s32.totalorder %s10, 0
    %p121 = por %p119, %p120
    %p122 = scmp.ne.s32.totalorder %s111, %s114
    %p123 = scmp.eq.s32.totalorder %s15, 1
    %p124 = por %p122, %p123
    %p125 = scmp.ne.s32.totalorder %s114, %s115
    %p126 = scmp.eq.s32.totalorder %s15, 0
    %p127 = por %p125, %p126
    %p128 = scmp.ne.s32.totalorder %s114, %s115
    %p129 = scmp.eq.s32.totalorder %s16, 1
    %p130 = por %p128, %p129
    %p132 = scmp.ne.s32.totalorder %s115, %s131
    %p133 = scmp.eq.s32.totalorder %s16, 0
    %p134 = por %p132, %p133
    %p135 = scmp.le.s32.totalorder 1, %s10
    %p136 = scmp.lt.s32.totalorder %s10, 3
    %p137 = pnand %p135, %p136
    %p138 = pneg %p137
    // Predicated region
    $region9: #{up_conv_forward.2} parent=5 // pred_check
      _
    $region10: #{up_conv_forward.2} parent=5 // pred_check_branch
      %140 = sbr.rel (%p137) target = $region12
    $region11: #{up_conv_forward.2} parent=5 // pred_region
      %s141 = ssub.s32 %s10, 1
      // Predicated region
      $region13: #{up_conv_forward.2} parent=11 // pred_check
        %p142 = pneg %p71
      $region14: #{up_conv_forward.2} parent=11 // pred_check_branch
        %144 = sbr.rel (%p142) target = $region16
      $region15: #{up_conv_forward.2} parent=11 // pred_region
        _
      $region16: #{up_conv_forward.2} parent=11 // pred_fallthru
        _
    $region12: #{up_conv_forward.2} parent=5 // pred_fallthru
      _
    %p145 = scmp.lt.s32.totalorder %s10, 2
    // Predicated region
    $region17: #{up_conv_forward.2} parent=5 // pred_check
      %p146 = pneg %p145
    $region18: #{up_conv_forward.2} parent=5 // pred_check_branch
      %148 = sbr.rel (%p146) target = $region20
    $region19: #{up_conv_forward.2} parent=5 // pred_region
      // Predicated region
      $region21: #{up_conv_forward.2} parent=19 // pred_check
        %p149 = pneg %p44
      $region22: #{up_conv_forward.2} parent=19 // pred_check_branch
        %151 = sbr.rel (%p149) target = $region24
      $region23: #{up_conv_forward.2} parent=19 // pred_region
        %p152 = scmp.lt.s32.totalorder %s17, 1
        %s153 = scalar_select %p152, %s17, 1
        %p154 = scmp.lt.s32.totalorder %s18, 0
        %s155 = scalar_select %p154, %s18, 0
        %s156 = smul.addr %s155, 3
        %s157 = smul.addr %s153, 3
        %s158 = sadd.s32 %s156, %s157
        %s159 = smul.addr %s158, 4
        %s160 = scalar_lea.vmem %s0, %s159
      $region24: #{up_conv_forward.2} parent=19 // pred_fallthru
        _
    $region20: #{up_conv_forward.2} parent=5 // pred_fallthru
      _
    %p161 = scmp.le.s32.totalorder 1, %s10
    %p162 = scmp.lt.s32.totalorder %s10, 3
    %p163 = pnand %p161, %p162
    %p164 = pneg %p163
    // Predicated region
    $region25: #{up_conv_forward.2} parent=5 // pred_check
      _
    $region26: #{up_conv_forward.2} parent=5 // pred_check_branch
      %166 = sbr.rel (%p163) target = $region28
    $region27: #{up_conv_forward.2} parent=5 // pred_region
      %s167 = ssub.s32 %s10, 1
      %p168 = scmp.lt.s32.totalorder %s19, 1
      %s169 = scalar_select %p168, %s19, 1
      %p170 = scmp.lt.s32.totalorder %s20, 0
      %s171 = scalar_select %p170, %s20, 0
      %s172 = smul.addr %s171, 3
      %s173 = smul.addr %s169, 3
      %s174 = sadd.s32 %s172, %s173
      %s175 = smul.addr %s174, 4
      %s176 = scalar_lea.vmem %s0, %s175
      %p177 = pneg %p50
      %p178 = pneg %p47
      %p179 = pneg %p71
      %p180 = pneg %p68
      %p181 = pneg %p99
      %p182 = pneg %p96
      %s183 = smul.u32 2, %s20
      %p184 = scmp.lt.s32.totalorder %s19, 1
      %s185 = scalar_select %p184, %s19, 1
      %p186 = scmp.lt.s32.totalorder %s183, 1
      %s187 = scalar_select %p186, %s183, 1
      %s188 = smul.addr %s187, 2
      %s189 = smul.addr %s185, 8
      %s190 = sadd.s32 %s188, %s189
      %s191 = smul.addr %s190, 4
      %s192 = scalar_lea.vmem %s2, %s191
      %p193 = pneg %p127
      %p194 = pneg %p124
      %p195 = scmp.lt.s32.totalorder %s19, 1
      %s196 = scalar_select %p195, %s19, 1
      %p197 = scmp.lt.s32.totalorder %s20, 0
      %s198 = scalar_select %p197, %s20, 0
      %s199 = smul.addr %s198, 2
      %s200 = smul.addr %s196, 2
      %s201 = sadd.s32 %s199, %s200
      %s202 = smul.addr %s201, 2
      %s203 = scalar_lea.vmem %s3, %s202
      %p204 = scmp.lt.s32.totalorder %s19, 1
      %s205 = scalar_select %p204, %s19, 1
      %p206 = scmp.lt.s32.totalorder %s20, 0
      %s207 = scalar_select %p206, %s20, 0
      %s208 = smul.addr %s207, 3
      %s209 = smul.addr %s205, 3
      %s210 = sadd.s32 %s208, %s209
      %s211 = smul.addr %s210, 4
      %s212 = scalar_lea.vmem %s0, %s211
      %s213 = smul.u32 2, %s20
      %p214 = scmp.lt.s32.totalorder %s19, 1
      %s215 = scalar_select %p214, %s19, 1
      %p216 = scmp.lt.s32.totalorder %s213, 1
      %s217 = scalar_select %p216, %s213, 1
      %s218 = smul.addr %s217, 2
      %s219 = smul.addr %s215, 8
      %s220 = sadd.s32 %s218, %s219
      %s221 = smul.addr %s220, 4
      %s222 = scalar_lea.vmem %s2, %s221
      %s223 = smul.u32 2, %s20
      %p224 = scmp.lt.s32.totalorder %s19, 1
      %s225 = scalar_select %p224, %s19, 1
      %p226 = scmp.lt.s32.totalorder %s20, 0
      %s227 = scalar_select %p226, %s20, 0
      %s228 = smul.addr %s227, 2
      %s229 = smul.addr %s225, 2
      %s230 = sadd.s32 %s228, %s229
      %s231 = smul.addr %s230, 2
      %s232 = scalar_lea.vmem %s3, %s231
      %v234 = vld [vmem:[%s212] sm:$0xf]
      %v235 = vld [vmem:[%s212 + $0x4] sm:$0xf]
      %v236 = vld [vmem:[%s1] sm:$0xff]
      %v237 = vld [vmem:[%s1 + $0x8] sm:$0xff]
      %v238 = vld [vmem:[%s1 + $0x10] sm:$0xff]
      %v239 = vld [vmem:[%s1 + $0x18] sm:$0xff]
      %v240 = vld [vmem:[%s1 + $0x20] sm:$0xff]
      %v241 = vld [vmem:[%s1 + $0x28] sm:$0xff]
      %v242 = vld [vmem:[%s1 + $0x30] sm:$0xff]
      %v243 = vld [vmem:[%s1 + $0x38] sm:$0xff]
      %v244 = vld [vmem:[%s1 + $0x40] sm:$0xff]
      %v245 = vld [vmem:[%s212 + $0x8] sm:$0x1]
      %s246 = scalar_lea.vmem %s1, 72
      %v247 = vld [vmem:[%s246] sm:$0xff]
      %v248 = vld [vmem:[%s246 + $0x8] sm:$0xff]
      %v249 = vld [vmem:[%s246 + $0x10] sm:$0xff]
      %v250 = vld [vmem:[%s246 + $0x18] sm:$0xff]
      %v251 = vld [vmem:[%s246 + $0x20] sm:$0xff]
      %v252 = vld [vmem:[%s246 + $0x28] sm:$0xff]
      %v253 = vld [vmem:[%s246 + $0x30] sm:$0xff]
      %v254 = vld [vmem:[%s246 + $0x38] sm:$0xff]
      %v255 = vld [vmem:[%s246 + $0x40] sm:$0xff]
      %v259 = vunpack.c.l.b16 %v234
      %v260 = vunpack.c.l.b16 %v235
      %v261 = vunpack.c.l.b16 %v245
      %v262 = vpack.c.b16 %v260, %v259
      %v263 = vpack.c.b16 %v261, %v261
      %vm264 = vsmask.f32 7424
      %v266 = vshrl.u32 %v262, 16
      %v268 = vshll.u32 %v262, 16
      %v270 = vrot.slane %v268, 1
      %v271 = vor.u32 %v266, %v270
      %v273 = vshll.u32 %v263, 16
      %v275 = vrot.slane %v273, 1
      %v276 = vsel %vm264, %v271, %v275
      %v286 = vunpack.c.l.b16 %v247
      %v287 = vunpack.c.h.b16 %v247
      %v288 = vunpack.c.l.b16 %v248
      %v289 = vunpack.c.h.b16 %v248
      %v290 = vunpack.c.l.b16 %v249
      %v291 = vunpack.c.h.b16 %v249
      %v292 = vunpack.c.l.b16 %v250
      %v293 = vunpack.c.h.b16 %v250
      %v294 = vunpack.c.l.b16 %v251
      %v295 = vunpack.c.h.b16 %v251
      %v296 = vunpack.c.l.b16 %v252
      %v297 = vunpack.c.h.b16 %v252
      %v298 = vunpack.c.l.b16 %v253
      %v299 = vunpack.c.h.b16 %v253
      %v300 = vunpack.c.l.b16 %v254
      %v301 = vunpack.c.h.b16 %v254
      %v302 = vunpack.c.l.b16 %v255
      %v303 = vunpack.c.h.b16 %v255
      %v304 = vpack.c.b16 %v288, %v286
      %v305 = vpack.c.b16 %v289, %v287
      %v306 = vpack.c.b16 %v292, %v290
      %v307 = vpack.c.b16 %v293, %v291
      %v308 = vpack.c.b16 %v296, %v294
      %v309 = vpack.c.b16 %v297, %v295
      %v310 = vpack.c.b16 %v300, %v298
      %v311 = vpack.c.b16 %v301, %v299
      %v312 = vpack.c.b16 %v302, %v302
      %v313 = vpack.c.b16 %v303, %v303
      %vm322 = vcmask 588800
      %v324 = vsel %vm322, %v276, 0
      %vm326 = vcmask 1043456
      %v328 = vsel %vm326, %v312, 0
      %v331 = vsel %vm326, %v313, 0
      %333 = vmatprep.subr.bf16.mxu0 %v305
      %334 = vmatpush1.bf16.msra.mxu0 %v304
      %335 = vmatprep.subr.bf16.mxu0 %v307
      %336 = vmatpush1.bf16.msra.mxu0 %v306
      %337 = vmatprep.subr.bf16.mxu0 %v309
      %338 = vmatpush1.bf16.msra.mxu0 %v308
      %339 = vmatprep.subr.bf16.mxu0 %v311
      %340 = vmatpush1.bf16.msra.mxu0 %v310
      %341 = vmatprep.subr.bf16.mxu0 %v331
      %342 = vmatpush1.bf16.msra.mxu0 %v328
      %343 = vmatprep.subr.bf16.mxu0 0
      %344 = vmatpush1.bf16.msra.mxu0 0
      %345 = vmatprep.subr.bf16.mxu0 0
      %346 = vmatpush1.bf16.msra.mxu0 0
      %347 = vmatprep.subr.bf16.mxu0 0
      %348 = vmatpush1.bf16.msra.mxu0 0
      %349 = vmatprep.subr.bf16.mxu0 0
      %350 = vmatpush1.bf16.msra.mxu0 0
      %351 = vmatprep.subr.bf16.mxu0 0
      %352 = vmatpush1.bf16.msra.mxu0 0
      %353 = vmatprep.subr.bf16.mxu0 0
      %354 = vmatpush1.bf16.msra.mxu0 0
      %355 = vmatprep.subr.bf16.mxu0 0
      %356 = vmatpush1.bf16.msra.mxu0 0
      %357 = vmatprep.subr.bf16.mxu0 0
      %358 = vmatpush1.bf16.msra.mxu0 0
      %359 = vmatprep.subr.bf16.mxu0 0
      %360 = vmatpush1.bf16.msra.mxu0 0
      %361 = vmatprep.subr.bf16.mxu0 0
      %362 = vmatpush1.bf16.msra.mxu0 0
      %363 = vmatprep.subr.bf16.mxu0 0
      %364 = vmatpush1.bf16.msra.mxu0 0
      %365 = vmatprep.mubr.bf16.mxu0 0
      %366 = vmatmul.mubr.bf16.gmra.mrb[0].mxu0 %v324
      %v367 = vpop.f32.mrb[0].mxu0
      %v368 = vadd.f32 0.0, %v367
      %v369 = vpop.f32.mrb[0].mxu0
      %v370 = vadd.f32 0.0, %v369
      %v371 = vpop.f32.mrb[0].mxu0
      %v372 = vadd.f32 0.0, %v371
      %v373 = vpop.f32.mrb[0].mxu0
      %v374 = vadd.f32 0.0, %v373
      %375 = vdwg.mxu0
      %v385 = vunpack.c.l.b16 %v236
      %v386 = vunpack.c.h.b16 %v236
      %v387 = vunpack.c.l.b16 %v237
      %v388 = vunpack.c.h.b16 %v237
      %v389 = vunpack.c.l.b16 %v238
      %v390 = vunpack.c.h.b16 %v238
      %v391 = vunpack.c.l.b16 %v239
      %v392 = vunpack.c.h.b16 %v239
      %v393 = vunpack.c.l.b16 %v240
      %v394 = vunpack.c.h.b16 %v240
      %v395 = vunpack.c.l.b16 %v241
      %v396 = vunpack.c.h.b16 %v241
      %v397 = vunpack.c.l.b16 %v242
      %v398 = vunpack.c.h.b16 %v242
      %v399 = vunpack.c.l.b16 %v243
      %v400 = vunpack.c.h.b16 %v243
      %v401 = vunpack.c.l.b16 %v244
      %v402 = vunpack.c.h.b16 %v244
      %v403 = vpack.c.b16 %v387, %v385
      %v404 = vpack.c.b16 %v388, %v386
      %v405 = vpack.c.b16 %v391, %v389
      %v406 = vpack.c.b16 %v392, %v390
      %v407 = vpack.c.b16 %v395, %v393
      %v408 = vpack.c.b16 %v396, %v394
      %v409 = vpack.c.b16 %v399, %v397
      %v410 = vpack.c.b16 %v400, %v398
      %v411 = vpack.c.b16 %v401, %v401
      %v412 = vpack.c.b16 %v402, %v402
      %v421 = vsel %vm322, %v262, 0
      %v424 = vsel %vm326, %v411, 0
      %v427 = vsel %vm326, %v412, 0
      %429 = vmatprep.subr.bf16.mxu0 %v404
      %430 = vmatpush1.bf16.msra.mxu0 %v403
      %431 = vmatprep.subr.bf16.mxu0 %v406
      %432 = vmatpush1.bf16.msra.mxu0 %v405
      %433 = vmatprep.subr.bf16.mxu0 %v408
      %434 = vmatpush1.bf16.msra.mxu0 %v407
      %435 = vmatprep.subr.bf16.mxu0 %v410
      %436 = vmatpush1.bf16.msra.mxu0 %v409
      %437 = vmatprep.subr.bf16.mxu0 %v427
      %438 = vmatpush1.bf16.msra.mxu0 %v424
      %439 = vmatprep.subr.bf16.mxu0 0
      %440 = vmatpush1.bf16.msra.mxu0 0
      %441 = vmatprep.subr.bf16.mxu0 0
      %442 = vmatpush1.bf16.msra.mxu0 0
      %443 = vmatprep.subr.bf16.mxu0 0
      %444 = vmatpush1.bf16.msra.mxu0 0
      %445 = vmatprep.subr.bf16.mxu0 0
      %446 = vmatpush1.bf16.msra.mxu0 0
      %447 = vmatprep.subr.bf16.mxu0 0
      %448 = vmatpush1.bf16.msra.mxu0 0
      %449 = vmatprep.subr.bf16.mxu0 0
      %450 = vmatpush1.bf16.msra.mxu0 0
      %451 = vmatprep.subr.bf16.mxu0 0
      %452 = vmatpush1.bf16.msra.mxu0 0
      %453 = vmatprep.subr.bf16.mxu0 0
      %454 = vmatpush1.bf16.msra.mxu0 0
      %455 = vmatprep.subr.bf16.mxu0 0
      %456 = vmatpush1.bf16.msra.mxu0 0
      %457 = vmatprep.subr.bf16.mxu0 0
      %458 = vmatpush1.bf16.msra.mxu0 0
      %459 = vmatprep.subr.bf16.mxu0 0
      %460 = vmatpush1.bf16.msra.mxu0 0
      %461 = vmatprep.mubr.bf16.mxu0 0
      %462 = vmatmul.mubr.bf16.gmra.mrb[0].mxu0 %v421
      %v463 = vpop.f32.mrb[0].mxu0
      %v464 = vadd.f32 %v368, %v463
      %v465 = vpop.f32.mrb[0].mxu0
      %v466 = vadd.f32 %v370, %v465
      %v467 = vpop.f32.mrb[0].mxu0
      %v468 = vadd.f32 %v372, %v467
      %v469 = vpop.f32.mrb[0].mxu0
      %v470 = vadd.f32 %v374, %v469
      %471 = vdwg.mxu0
      %v472 = vpack.c.bf16 %v468, %v464
      %v473 = vpack.c.bf16 %v470, %v466
      %v476 = vunpack.c.l.b16 %v472
      %v477 = vunpack.c.l.b16 %v473
      %v478 = vunpack.c.h.b16 %v472
      %v479 = vunpack.c.h.b16 %v473
      %v480 = vpack.c.b16 %v477, %v476
      %v481 = vpack.c.b16 %v479, %v478
      %484 = vst [vmem:[%s222] sm:$0xff] %v480
      %485 = vst [vmem:[%s222 + $0x8] sm:$0xff] %v481
      %v486 = vadd.f32 %v464, %v468
      %v487 = vrot.slane %v486, 4
      %v488 = vadd.f32 %v486, %v487
      %v489 = vrot.slane %v488, 2
      %v490 = vadd.f32 %v488, %v489
      %v491 = vrot.slane %v490, 1
      %v492 = vadd.f32 %v490, %v491
      %v493 = vadd.f32 %v466, %v470
      %v494 = vrot.slane %v493, 4
      %v495 = vadd.f32 %v493, %v494
      %v496 = vrot.slane %v495, 2
      %v497 = vadd.f32 %v495, %v496
      %v498 = vrot.slane %v497, 1
      %v499 = vadd.f32 %v497, %v498
      %v500 = vadd.f32 %v492, 0.0
      %v501 = vadd.f32 %v499, 0.0
      %v502 = vmul.f32 %v464, %v464
      %v503 = vmul.f32 %v466, %v466
      %v504 = vmul.f32 %v468, %v468
      %v505 = vmul.f32 %v470, %v470
      %v506 = vadd.f32 %v502, %v504
      %v507 = vrot.slane %v506, 4
      %v508 = vadd.f32 %v506, %v507
      %v509 = vrot.slane %v508, 2
      %v510 = vadd.f32 %v508, %v509
      %v511 = vrot.slane %v510, 1
      %v512 = vadd.f32 %v510, %v511
      %v513 = vadd.f32 %v503, %v505
      %v514 = vrot.slane %v513, 4
      %v515 = vadd.f32 %v513, %v514
      %v516 = vrot.slane %v515, 2
      %v517 = vadd.f32 %v515, %v516
      %v518 = vrot.slane %v517, 1
      %v519 = vadd.f32 %v517, %v518
      %v520 = vadd.f32 %v512, 0.0
      %v521 = vadd.f32 %v519, 0.0
      %v522 = vld [vmem:[%s212] sm:$0xf]
      %v523 = vld [vmem:[%s212 + $0x4] sm:$0xf]
      %v524 = vld [vmem:[%s212 + $0x8] sm:$0x1]
      %s525 = scalar_lea.vmem %s1, 144
      %v526 = vld [vmem:[%s525] sm:$0xff]
      %v527 = vld [vmem:[%s525 + $0x8] sm:$0xff]
      %v528 = vld [vmem:[%s525 + $0x10] sm:$0xff]
      %v529 = vld [vmem:[%s525 + $0x18] sm:$0xff]
      %v530 = vld [vmem:[%s525 + $0x20] sm:$0xff]
      %v531 = vld [vmem:[%s525 + $0x28] sm:$0xff]
      %v532 = vld [vmem:[%s525 + $0x30] sm:$0xff]
      %v533 = vld [vmem:[%s525 + $0x38] sm:$0xff]
      %v534 = vld [vmem:[%s525 + $0x40] sm:$0xff]
      %v535 = vld [vmem:[%s212] sm:$0xe]
      %s536 = scalar_lea.vmem %s1, 216
      %v537 = vld [vmem:[%s536] sm:$0xff]
      %v538 = vld [vmem:[%s536 + $0x8] sm:$0xff]
      %v539 = vld [vmem:[%s536 + $0x10] sm:$0xff]
      %v540 = vld [vmem:[%s536 + $0x18] sm:$0xff]
      %v541 = vld [vmem:[%s536 + $0x20] sm:$0xff]
      %v542 = vld [vmem:[%s536 + $0x28] sm:$0xff]
      %v543 = vld [vmem:[%s536 + $0x30] sm:$0xff]
      %v544 = vld [vmem:[%s536 + $0x38] sm:$0xff]
      %v545 = vld [vmem:[%s536 + $0x40] sm:$0xff]
      %v549 = vunpack.c.l.b16 %v535
      %v550 = vunpack.c.l.b16 %v523
      %v551 = vunpack.c.l.b16 %v524
      %v552 = vpack.c.b16 %v550, %v549
      %v553 = vpack.c.b16 %v551, %v551
      %vm554 = vcmask 1046528
      %v555 = vrot.slane %v552, 1
      %v556 = vrot.slane %v553, 1
      %v557 = vsel %vm554, %v555, %v556
      %v567 = vunpack.c.l.b16 %v537
      %v568 = vunpack.c.h.b16 %v537
      %v569 = vunpack.c.l.b16 %v538
      %v570 = vunpack.c.h.b16 %v538
      %v571 = vunpack.c.l.b16 %v539
      %v572 = vunpack.c.h.b16 %v539
      %v573 = vunpack.c.l.b16 %v540
      %v574 = vunpack.c.h.b16 %v540
      %v575 = vunpack.c.l.b16 %v541
      %v576 = vunpack.c.h.b16 %v541
      %v577 = vunpack.c.l.b16 %v542
      %v578 = vunpack.c.h.b16 %v542
      %v579 = vunpack.c.l.b16 %v543
      %v580 = vunpack.c.h.b16 %v543
      %v581 = vunpack.c.l.b16 %v544
      %v582 = vunpack.c.h.b16 %v544
      %v583 = vunpack.c.l.b16 %v545
      %v584 = vunpack.c.h.b16 %v545
      %v585 = vpack.c.b16 %v569, %v567
      %v586 = vpack.c.b16 %v570, %v568
      %v587 = vpack.c.b16 %v573, %v571
      %v588 = vpack.c.b16 %v574, %v572
      %v589 = vpack.c.b16 %v577, %v575
      %v590 = vpack.c.b16 %v578, %v576
      %v591 = vpack.c.b16 %v581, %v579
      %v592 = vpack.c.b16 %v582, %v580
      %v593 = vpack.c.b16 %v583, %v583
      %v594 = vpack.c.b16 %v584, %v584
      %v604 = vsel %vm322, %v557, 0
      %v607 = vsel %vm326, %v593, 0
      %v610 = vsel %vm326, %v594, 0
      %612 = vmatprep.subr.bf16.mxu0 %v586
      %613 = vmatpush1.bf16.msra.mxu0 %v585
      %614 = vmatprep.subr.bf16.mxu0 %v588
      %615 = vmatpush1.bf16.msra.mxu0 %v587
      %616 = vmatprep.subr.bf16.mxu0 %v590
      %617 = vmatpush1.bf16.msra.mxu0 %v589
      %618 = vmatprep.subr.bf16.mxu0 %v592
      %619 = vmatpush1.bf16.msra.mxu0 %v591
      %620 = vmatprep.subr.bf16.mxu0 %v610
      %621 = vmatpush1.bf16.msra.mxu0 %v607
      %622 = vmatprep.subr.bf16.mxu0 0
      %623 = vmatpush1.bf16.msra.mxu0 0
      %624 = vmatprep.subr.bf16.mxu0 0
      %625 = vmatpush1.bf16.msra.mxu0 0
      %626 = vmatprep.subr.bf16.mxu0 0
      %627 = vmatpush1.bf16.msra.mxu0 0
      %628 = vmatprep.subr.bf16.mxu0 0
      %629 = vmatpush1.bf16.msra.mxu0 0
      %630 = vmatprep.subr.bf16.mxu0 0
      %631 = vmatpush1.bf16.msra.mxu0 0
      %632 = vmatprep.subr.bf16.mxu0 0
      %633 = vmatpush1.bf16.msra.mxu0 0
      %634 = vmatprep.subr.bf16.mxu0 0
      %635 = vmatpush1.bf16.msra.mxu0 0
      %636 = vmatprep.subr.bf16.mxu0 0
      %637 = vmatpush1.bf16.msra.mxu0 0
      %638 = vmatprep.subr.bf16.mxu0 0
      %639 = vmatpush1.bf16.msra.mxu0 0
      %640 = vmatprep.subr.bf16.mxu0 0
      %641 = vmatpush1.bf16.msra.mxu0 0
      %642 = vmatprep.subr.bf16.mxu0 0
      %643 = vmatpush1.bf16.msra.mxu0 0
      %644 = vmatprep.mubr.bf16.mxu0 0
      %645 = vmatmul.mubr.bf16.gmra.mrb[0].mxu0 %v604
      %v646 = vpop.f32.mrb[0].mxu0
      %v647 = vadd.f32 0.0, %v646
      %v648 = vpop.f32.mrb[0].mxu0
      %v649 = vadd.f32 0.0, %v648
      %v650 = vpop.f32.mrb[0].mxu0
      %v651 = vadd.f32 0.0, %v650
      %v652 = vpop.f32.mrb[0].mxu0
      %v653 = vadd.f32 0.0, %v652
      %654 = vdwg.mxu0
      %v656 = vunpack.c.l.b16 %v522
      %v657 = vpack.c.b16 %v550, %v656
      %v659 = vshrl.u32 %v657, 16
      %v661 = vshll.u32 %v657, 16
      %v663 = vrot.slane %v661, 1
      %v664 = vor.u32 %v659, %v663
      %v666 = vshll.u32 %v553, 16
      %v668 = vrot.slane %v666, 1
      %v669 = vsel %vm264, %v664, %v668
      %v679 = vunpack.c.l.b16 %v526
      %v680 = vunpack.c.h.b16 %v526
      %v681 = vunpack.c.l.b16 %v527
      %v682 = vunpack.c.h.b16 %v527
      %v683 = vunpack.c.l.b16 %v528
      %v684 = vunpack.c.h.b16 %v528
      %v685 = vunpack.c.l.b16 %v529
      %v686 = vunpack.c.h.b16 %v529
      %v687 = vunpack.c.l.b16 %v530
      %v688 = vunpack.c.h.b16 %v530
      %v689 = vunpack.c.l.b16 %v531
      %v690 = vunpack.c.h.b16 %v531
      %v691 = vunpack.c.l.b16 %v532
      %v692 = vunpack.c.h.b16 %v532
      %v693 = vunpack.c.l.b16 %v533
      %v694 = vunpack.c.h.b16 %v533
      %v695 = vunpack.c.l.b16 %v534
      %v696 = vunpack.c.h.b16 %v534
      %v697 = vpack.c.b16 %v681, %v679
      %v698 = vpack.c.b16 %v682, %v680
      %v699 = vpack.c.b16 %v685, %v683
      %v700 = vpack.c.b16 %v686, %v684
      %v701 = vpack.c.b16 %v689, %v687
      %v702 = vpack.c.b16 %v690, %v688
      %v703 = vpack.c.b16 %v693, %v691
      %v704 = vpack.c.b16 %v694, %v692
      %v705 = vpack.c.b16 %v695, %v695
      %v706 = vpack.c.b16 %v696, %v696
      %v716 = vsel %vm322, %v669, 0
      %v719 = vsel %vm326, %v705, 0
      %v722 = vsel %vm326, %v706, 0
      %724 = vmatprep.subr.bf16.mxu0 %v698
      %725 = vmatpush1.bf16.msra.mxu0 %v697
      %726 = vmatprep.subr.bf16.mxu0 %v700
      %727 = vmatpush1.bf16.msra.mxu0 %v699
      %728 = vmatprep.subr.bf16.mxu0 %v702
      %729 = vmatpush1.bf16.msra.mxu0 %v701
      %730 = vmatprep.subr.bf16.mxu0 %v704
      %731 = vmatpush1.bf16.msra.mxu0 %v703
      %732 = vmatprep.subr.bf16.mxu0 %v722
      %733 = vmatpush1.bf16.msra.mxu0 %v719
      %734 = vmatprep.subr.bf16.mxu0 0
      %735 = vmatpush1.bf16.msra.mxu0 0
      %736 = vmatprep.subr.bf16.mxu0 0
      %737 = vmatpush1.bf16.msra.mxu0 0
      %738 = vmatprep.subr.bf16.mxu0 0
      %739 = vmatpush1.bf16.msra.mxu0 0
      %740 = vmatprep.subr.bf16.mxu0 0
      %741 = vmatpush1.bf16.msra.mxu0 0
      %742 = vmatprep.subr.bf16.mxu0 0
      %743 = vmatpush1.bf16.msra.mxu0 0
      %744 = vmatprep.subr.bf16.mxu0 0
      %745 = vmatpush1.bf16.msra.mxu0 0
      %746 = vmatprep.subr.bf16.mxu0 0
      %747 = vmatpush1.bf16.msra.mxu0 0
      %748 = vmatprep.subr.bf16.mxu0 0
      %749 = vmatpush1.bf16.msra.mxu0 0
      %750 = vmatprep.subr.bf16.mxu0 0
      %751 = vmatpush1.bf16.msra.mxu0 0
      %752 = vmatprep.subr.bf16.mxu0 0
      %753 = vmatpush1.bf16.msra.mxu0 0
      %754 = vmatprep.subr.bf16.mxu0 0
      %755 = vmatpush1.bf16.msra.mxu0 0
      %756 = vmatprep.mubr.bf16.mxu0 0
      %757 = vmatmul.mubr.bf16.gmra.mrb[0].mxu0 %v716
      %v758 = vpop.f32.mrb[0].mxu0
      %v759 = vadd.f32 %v647, %v758
      %v760 = vpop.f32.mrb[0].mxu0
      %v761 = vadd.f32 %v649, %v760
      %v762 = vpop.f32.mrb[0].mxu0
      %v763 = vadd.f32 %v651, %v762
      %v764 = vpop.f32.mrb[0].mxu0
      %v765 = vadd.f32 %v653, %v764
      %766 = vdwg.mxu0
      %v767 = vpack.c.bf16 %v763, %v759
      %v768 = vpack.c.bf16 %v765, %v761
      %v771 = vunpack.c.l.b16 %v767
      %v772 = vunpack.c.l.b16 %v768
      %v773 = vunpack.c.h.b16 %v767
      %v774 = vunpack.c.h.b16 %v768
      %v775 = vpack.c.b16 %v772, %v771
      %v776 = vpack.c.b16 %v774, %v773
      %s779 = scalar_lea.vmem %s222, 16
      %780 = vst [vmem:[%s779] sm:$0xff] %v775
      %781 = vst [vmem:[%s779 + $0x8] sm:$0xff] %v776
      %v782 = vadd.f32 %v759, %v763
      %v783 = vrot.slane %v782, 4
      %v784 = vadd.f32 %v782, %v783
      %v785 = vrot.slane %v784, 2
      %v786 = vadd.f32 %v784, %v785
      %v787 = vrot.slane %v786, 1
      %v788 = vadd.f32 %v786, %v787
      %v789 = vadd.f32 %v761, %v765
      %v790 = vrot.slane %v789, 4
      %v791 = vadd.f32 %v789, %v790
      %v792 = vrot.slane %v791, 2
      %v793 = vadd.f32 %v791, %v792
      %v794 = vrot.slane %v793, 1
      %v795 = vadd.f32 %v793, %v794
      %v796 = vadd.f32 %v500, %v788
      %v797 = vadd.f32 %v501, %v795
      %v798 = vmul.f32 %v759, %v759
      %v799 = vmul.f32 %v761, %v761
      %v800 = vmul.f32 %v763, %v763
      %v801 = vmul.f32 %v765, %v765
      %v802 = vadd.f32 %v798, %v800
      %v803 = vrot.slane %v802, 4
      %v804 = vadd.f32 %v802, %v803
      %v805 = vrot.slane %v804, 2
      %v806 = vadd.f32 %v804, %v805
      %v807 = vrot.slane %v806, 1
      %v808 = vadd.f32 %v806, %v807
      %v809 = vadd.f32 %v799, %v801
      %v810 = vrot.slane %v809, 4
      %v811 = vadd.f32 %v809, %v810
      %v812 = vrot.slane %v811, 2
      %v813 = vadd.f32 %v811, %v812
      %v814 = vrot.slane %v813, 1
      %v815 = vadd.f32 %v813, %v814
      %v816 = vadd.f32 %v520, %v808
      %v817 = vadd.f32 %v521, %v815
      %v820 = vcombine.low %v796, %v797
      %v822 = vunpack.c.l.s4 1966171168
      %v823 = vunpack.c.0.s8 %v822
      %v824 = vlaneseq
      %v825 = vshrl.u32 %v824, 7
      %v826 = vsub.s32 %v823, %v825
      %v827 = vrot.slane %v820, %v826
      %v829 = vunpack.c.l.s4 1966171168
      %v830 = vunpack.c.0.s8 %v829
      %v831 = vlaneseq
      %v832 = vshrl.u32 %v831, 7
      %v833 = vsub.s32 %v830, %v832
      %v834 = vrot.slane %v827, %v833
      %v836 = vlaneseq
      %vm837 = vcmp.ge.s32.totalorder %v836, 0
      %vm838 = vcmp.lt.s32.totalorder %v836, 256
      %vm839 = vmand %vm837, %vm838
      %840 = vst.msk [vmem:[%s232] ss:$2 sm:$0x3] %vm839, %v834
      %v843 = vcombine.low %v816, %v817
      %v845 = vunpack.c.l.s4 1966171168
      %v846 = vunpack.c.0.s8 %v845
      %v847 = vlaneseq
      %v848 = vshrl.u32 %v847, 7
      %v849 = vsub.s32 %v846, %v848
      %v850 = vrot.slane %v843, %v849
      %v852 = vunpack.c.l.s4 1966171168
      %v853 = vunpack.c.0.s8 %v852
      %v854 = vlaneseq
      %v855 = vshrl.u32 %v854, 7
      %v856 = vsub.s32 %v853, %v855
      %v857 = vrot.slane %v850, %v856
      %s859 = scalar_lea.vmem %s232, 1
      %860 = vst.msk [vmem:[%s859] ss:$2 sm:$0x3] %vm839, %v857
      %s861 = smul.u32 2, %s20
      %p862 = scmp.lt.s32.totalorder %s19, 1
      %s863 = scalar_select %p862, %s19, 1
      %p864 = scmp.lt.s32.totalorder %s861, 1
      %s865 = scalar_select %p864, %s861, 1
      %s866 = smul.addr %s865, 2
      %s867 = smul.addr %s863, 8
      %s868 = sadd.s32 %s866, %s867
      %s869 = smul.addr %s868, 4
      %s870 = scalar_lea.vmem %s2, %s869
      %p871 = scmp.lt.s32.totalorder %s19, 1
      %s872 = scalar_select %p871, %s19, 1
      %p873 = scmp.lt.s32.totalorder %s20, 0
      %s874 = scalar_select %p873, %s20, 0
      %s875 = smul.addr %s874, 2
      %s876 = smul.addr %s872, 2
      %s877 = sadd.s32 %s875, %s876
      %s878 = smul.addr %s877, 2
      %s879 = scalar_lea.vmem %s3, %s878
      // Predicated region
      $region29: #{up_conv_forward.2} parent=27 // pred_check
        %p880 = pneg %p96
      $region30: #{up_conv_forward.2} parent=27 // pred_check_branch
        %882 = sbr.rel (%p880) target = $region32
      $region31: #{up_conv_forward.2} parent=27 // pred_region
        %s883 = smul.u32 2, %s20
      $region32: #{up_conv_forward.2} parent=27 // pred_fallthru
        _
      // Predicated region
      $region33: #{up_conv_forward.2} parent=27 // pred_check
        %p884 = pneg %p124
      $region34: #{up_conv_forward.2} parent=27 // pred_check_branch
        %886 = sbr.rel (%p884) target = $region36
      $region35: #{up_conv_forward.2} parent=27 // pred_region
        _
      $region36: #{up_conv_forward.2} parent=27 // pred_fallthru
        _
    $region28: #{up_conv_forward.2} parent=5 // pred_fallthru
      _
    %p887 = scmp.le.s32.totalorder 2, %s10
    // Predicated region
    $region37: #{up_conv_forward.2} parent=5 // pred_check
      %p888 = pneg %p887
    $region38: #{up_conv_forward.2} parent=5 // pred_check_branch
      %890 = sbr.rel (%p888) target = $region40
    $region39: #{up_conv_forward.2} parent=5 // pred_region
      %s891 = ssub.s32 %s10, 2
      // Predicated region
      $region41: #{up_conv_forward.2} parent=39 // pred_check
        %p892 = pneg %p102
      $region42: #{up_conv_forward.2} parent=39 // pred_check_branch
        %894 = sbr.rel (%p892) target = $region44
      $region43: #{up_conv_forward.2} parent=39 // pred_region
        %s895 = smul.u32 2, %s22
        %p896 = scmp.lt.s32.totalorder %s21, 1
        %s897 = scalar_select %p896, %s21, 1
        %p898 = scmp.lt.s32.totalorder %s895, 1
        %s899 = scalar_select %p898, %s895, 1
        %s900 = smul.addr %s899, 2
        %s901 = smul.addr %s897, 8
        %s902 = sadd.s32 %s900, %s901
        %s903 = smul.addr %s902, 4
        %s904 = scalar_lea.vmem %s2, %s903
      $region44: #{up_conv_forward.2} parent=39 // pred_fallthru
        _
      // Predicated region
      $region45: #{up_conv_forward.2} parent=39 // pred_check
        %p905 = pneg %p130
      $region46: #{up_conv_forward.2} parent=39 // pred_check_branch
        %907 = sbr.rel (%p905) target = $region48
      $region47: #{up_conv_forward.2} parent=39 // pred_region
        %p908 = scmp.lt.s32.totalorder %s21, 1
        %s909 = scalar_select %p908, %s21, 1
        %p910 = scmp.lt.s32.totalorder %s22, 0
        %s911 = scalar_select %p910, %s22, 0
        %s912 = smul.addr %s911, 2
        %s913 = smul.addr %s909, 2
        %s914 = sadd.s32 %s912, %s913
        %s915 = smul.addr %s914, 2
        %s916 = scalar_lea.vmem %s3, %s915
      $region48: #{up_conv_forward.2} parent=39 // pred_fallthru
        _
    $region40: #{up_conv_forward.2} parent=5 // pred_fallthru
      _
  $region6: #{up_conv_forward.2} parent=0 // loop_footer
    %s14 = sadd.s32 1, %s10
  $region7: #{up_conv_forward.2} parent=0 // loop_footer_branch
    %9 = sbr.rel target = $region3
  $region8: #{up_conv_forward.2} parent=0 // loop_exit
    _

// kernel: up_conv_forward.3
$region0: #{up_conv_forward.3}
  #allocation0 [shape = 'u32[]', space=smem, size = 0x4, offset = 0x4, fixed_abs, tag = 'smem constant byte address 0x4 - core index']
  #allocation1 [shape = 'u32[144,128]{1,0:T(1,128)}', space=vmem, size = 0x12000, scoped, tag = 'internal scratch']
  %s0 = inlined_call_operand.vmem [shape: bf16[64,256], index: 0, kind: input, shape index: {}]
  %s1 = inlined_call_operand.vmem [shape: f32[1,256], index: 1, kind: input, shape index: {}]
  %s2 = inlined_call_operand.vmem [shape: f32[1,256], index: 2, kind: input, shape index: {}]
  %s3 = inlined_call_operand.vmem [shape: f32[64,256], index: 3, kind: output, shape index: {}]
  %s4 = sld [smem:[#allocation0]]
  $region22: #{up_conv_forward.3} parent=0
    _
  %s6 = ssub.s32 1, %s4
  %s7 = scalar_select 0, %s6, %s4
  // Predicated region
  $region2: #{up_conv_forward.3} parent=0 // pred_check
    _
  $region3: #{up_conv_forward.3} parent=0 // pred_check_branch
    %9 = sbr.rel (0) target = $region5
  $region4: #{up_conv_forward.3} parent=0 // pred_region
    _
  $region5: #{up_conv_forward.3} parent=0 // pred_fallthru
    _
  // Predicated region
  $region6: #{up_conv_forward.3} parent=0 // pred_check
    _
  $region7: #{up_conv_forward.3} parent=0 // pred_check_branch
    %11 = sbr.rel (0) target = $region9
  $region8: #{up_conv_forward.3} parent=0 // pred_region
    _
  $region9: #{up_conv_forward.3} parent=0 // pred_fallthru
    _
  // Predicated region
  $region10: #{up_conv_forward.3} parent=0 // pred_check
    _
  $region11: #{up_conv_forward.3} parent=0 // pred_check_branch
    %13 = sbr.rel (0) target = $region13
  $region12: #{up_conv_forward.3} parent=0 // pred_region
    _
  $region13: #{up_conv_forward.3} parent=0 // pred_fallthru
    _
  %v14 = vld [vmem:[%s0] sm:$0xff]
  %v15 = vld [vmem:[%s0 + $0x8] sm:$0xff]
  %v16 = vld [vmem:[%s0 + $0x10] sm:$0xff]
  %v17 = vld [vmem:[%s0 + $0x18] sm:$0xff]
  %v18 = vld [vmem:[%s0 + $0x20] sm:$0xff]
  %v19 = vld [vmem:[%s0 + $0x28] sm:$0xff]
  %v20 = vld [vmem:[%s0 + $0x30] sm:$0xff]
  %v21 = vld [vmem:[%s0 + $0x38] sm:$0xff]
  %v22 = vunpack.c.l.bf16 %v14
  %v23 = vunpack.c.h.bf16 %v14
  %v24 = vunpack.c.l.bf16 %v15
  %v25 = vunpack.c.h.bf16 %v15
  %v26 = vunpack.c.l.bf16 %v16
  %v27 = vunpack.c.h.bf16 %v16
  %v28 = vunpack.c.l.bf16 %v17
  %v29 = vunpack.c.h.bf16 %v17
  %v30 = vunpack.c.l.bf16 %v18
  %v31 = vunpack.c.h.bf16 %v18
  %v32 = vunpack.c.l.bf16 %v19
  %v33 = vunpack.c.h.bf16 %v19
  %v34 = vunpack.c.l.bf16 %v20
  %v35 = vunpack.c.h.bf16 %v20
  %v36 = vunpack.c.l.bf16 %v21
  %v37 = vunpack.c.h.bf16 %v21
  %v38 = vld [vmem:[%s1] sm:$0x3]
  %v40 = vlaneseq
  %v41 = vshrl.u32 %v40, 7
  %v42 = vsub.s32 0, %v41
  %v43 = vrot.slane %v38, %v42
  %v44 = vlaneseq
  %v45 = vshrl.u32 %v44, 7
  %v46 = vsub.s32 1, %v45
  %v47 = vrot.slane %v38, %v46
  %v50 = vmul.f32 %v22, %v43
  %v51 = vmul.f32 %v23, %v47
  %v52 = vmul.f32 %v24, %v43
  %v53 = vmul.f32 %v25, %v47
  %v54 = vmul.f32 %v26, %v43
  %v55 = vmul.f32 %v27, %v47
  %v56 = vmul.f32 %v28, %v43
  %v57 = vmul.f32 %v29, %v47
  %v58 = vmul.f32 %v30, %v43
  %v59 = vmul.f32 %v31, %v47
  %v60 = vmul.f32 %v32, %v43
  %v61 = vmul.f32 %v33, %v47
  %v62 = vmul.f32 %v34, %v43
  %v63 = vmul.f32 %v35, %v47
  %v64 = vmul.f32 %v36, %v43
  %v65 = vmul.f32 %v37, %v47
  %v66 = vld [vmem:[%s2] sm:$0x3]
  %v68 = vlaneseq
  %v69 = vshrl.u32 %v68, 7
  %v70 = vsub.s32 0, %v69
  %v71 = vrot.slane %v66, %v70
  %v72 = vlaneseq
  %v73 = vshrl.u32 %v72, 7
  %v74 = vsub.s32 1, %v73
  %v75 = vrot.slane %v66, %v74
  %v78 = vadd.f32 %v50, %v71
  %v79 = vadd.f32 %v51, %v75
  %v80 = vadd.f32 %v52, %v71
  %v81 = vadd.f32 %v53, %v75
  %v82 = vadd.f32 %v54, %v71
  %v83 = vadd.f32 %v55, %v75
  %v84 = vadd.f32 %v56, %v71
  %v85 = vadd.f32 %v57, %v75
  %v86 = vadd.f32 %v58, %v71
  %v87 = vadd.f32 %v59, %v75
  %v88 = vadd.f32 %v60, %v71
  %v89 = vadd.f32 %v61, %v75
  %v90 = vadd.f32 %v62, %v71
  %v91 = vadd.f32 %v63, %v75
  %v92 = vadd.f32 %v64, %v71
  %v93 = vadd.f32 %v65, %v75
  %v94 = vmax.f32 %v78, 0.0
  %v95 = vmax.f32 %v79, 0.0
  %v96 = vmax.f32 %v80, 0.0
  %v97 = vmax.f32 %v81, 0.0
  %v98 = vmax.f32 %v82, 0.0
  %v99 = vmax.f32 %v83, 0.0
  %v100 = vmax.f32 %v84, 0.0
  %v101 = vmax.f32 %v85, 0.0
  %v102 = vmax.f32 %v86, 0.0
  %v103 = vmax.f32 %v87, 0.0
  %v104 = vmax.f32 %v88, 0.0
  %v105 = vmax.f32 %v89, 0.0
  %v106 = vmax.f32 %v90, 0.0
  %v107 = vmax.f32 %v91, 0.0
  %v108 = vmax.f32 %v92, 0.0
  %v109 = vmax.f32 %v93, 0.0
  %110 = vst [vmem:[%s3] sm:$0xff] %v94
  %111 = vst [vmem:[%s3 + $0x8] sm:$0xff] %v95
  %112 = vst [vmem:[%s3 + $0x10] sm:$0xff] %v96
  %113 = vst [vmem:[%s3 + $0x18] sm:$0xff] %v97
  %114 = vst [vmem:[%s3 + $0x20] sm:$0xff] %v98
  %115 = vst [vmem:[%s3 + $0x28] sm:$0xff] %v99
  %116 = vst [vmem:[%s3 + $0x30] sm:$0xff] %v100
  %117 = vst [vmem:[%s3 + $0x38] sm:$0xff] %v101
  %118 = vst [vmem:[%s3 + $0x40] sm:$0xff] %v102
  %119 = vst [vmem:[%s3 + $0x48] sm:$0xff] %v103
  %120 = vst [vmem:[%s3 + $0x50] sm:$0xff] %v104
  %121 = vst [vmem:[%s3 + $0x58] sm:$0xff] %v105
  %122 = vst [vmem:[%s3 + $0x60] sm:$0xff] %v106
  %123 = vst [vmem:[%s3 + $0x68] sm:$0xff] %v107
  %124 = vst [vmem:[%s3 + $0x70] sm:$0xff] %v108
  %125 = vst [vmem:[%s3 + $0x78] sm:$0xff] %v109
  // Predicated region
  $region14: #{up_conv_forward.3} parent=0 // pred_check
    _
  $region15: #{up_conv_forward.3} parent=0 // pred_check_branch
    %127 = sbr.rel (0) target = $region17
  $region16: #{up_conv_forward.3} parent=0 // pred_region
    _
  $region17: #{up_conv_forward.3} parent=0 // pred_fallthru
    _
  // Predicated region
  $region18: #{up_conv_forward.3} parent=0 // pred_check
    _
  $region19: #{up_conv_forward.3} parent=0 // pred_check_branch
    %129 = sbr.rel (0) target = $region21
  $region20: #{up_conv_forward.3} parent=0 // pred_region
    _
  $region21: #{up_conv_forward.3} parent=0 // pred_fallthru
    _

</llo_original>
